<compile_context>
chip_gen: v7x
topology: tpu7x:2x2x1
jax: 0.10.0
libtpu: 0.0.40
codegen_flags: <defaults>
</compile_context>

<pallas_src>
import jax
import jax.numpy as jnp
from jax.experimental import pallas as pl
from jax.experimental.pallas import tpu as pltpu


def mlp_kernel(x_ref, w1_ref, b1_ref, w2_ref, b2_ref, w3_ref, b3_ref, o_ref):
    # Layer 1: Linear + ReLU (bf16 MXU inputs, f32 accumulate, f32 elementwise)
    h1 = jnp.dot(x_ref[...], w1_ref[...], preferred_element_type=jnp.float32)
    h1 = jnp.maximum(h1 + b1_ref[...], 0.0)
    # Layer 2: Linear + ReLU
    h2 = jnp.dot(h1.astype(jnp.bfloat16), w2_ref[...],
                 preferred_element_type=jnp.float32)
    h2 = jnp.maximum(h2 + b2_ref[...], 0.0)
    # Layer 3: Linear (logits padded to 128 lanes for a lane-dense store)
    out = jnp.dot(h2.astype(jnp.bfloat16), w3_ref[...],
                  preferred_element_type=jnp.float32)
    o_ref[...] = (out + b3_ref[...]).astype(o_ref.dtype)


@jax.jit
def mlp_forward(x, w1, b1, w2, b2, w3, b3):
    B, d_in = x.shape
    n_out = w3.shape[1]

    # Lane-dense output path: pad the 2-wide final layer to 128 output lanes.
    n_pad = 128
    w3p = jnp.zeros((w3.shape[0], n_pad), w3.dtype).at[:, :n_out].set(w3)
    b3p = jnp.zeros((1, n_pad), b3.dtype).at[:, :n_out].set(b3)

    # Batch tiling: small batches run as one (8-aligned) block; large batches
    # stream 256-row tiles through the grid with weights resident in VMEM.
    max_tile = 256
    if B <= max_tile:
        tb = max(8, ((B + 7) // 8) * 8)
    else:
        tb = max_tile
    n_tiles = pl.cdiv(B, tb)
    b_pad = n_tiles * tb
    if b_pad != B:
        x = jnp.pad(x, ((0, b_pad - B), (0, 0)))

    # bf16 matmul operands (MXU-native); biases stay f32.
    # TODO(synk): optional fp8 path for the 512x128 weight on v7x if accuracy allows.
    xb = x.astype(jnp.bfloat16)
    w1b = w1.astype(jnp.bfloat16)
    w2b = w2.astype(jnp.bfloat16)
    w3b = w3p.astype(jnp.bfloat16)

    out = pl.pallas_call(
        mlp_kernel,
        out_shape=jax.ShapeDtypeStruct((b_pad, n_pad), jnp.float32),
        grid=(n_tiles,),
        in_specs=[
            pl.BlockSpec((tb, d_in), lambda i: (i, 0)),   # x: tiled over batch
            pl.BlockSpec(w1b.shape, lambda i: (0, 0)),    # weights/biases pinned
            pl.BlockSpec(b1.shape, lambda i: (0, 0)),
            pl.BlockSpec(w2b.shape, lambda i: (0, 0)),
            pl.BlockSpec(b2.shape, lambda i: (0, 0)),
            pl.BlockSpec(w3b.shape, lambda i: (0, 0)),
            pl.BlockSpec(b3p.shape, lambda i: (0, 0)),
        ],
        out_specs=pl.BlockSpec((tb, n_pad), lambda i: (i, 0)),
        compiler_params=pltpu.CompilerParams(
            dimension_semantics=("parallel",),  # megacore split on v7x
        ),
    )(xb, w1b, b1, w2b, b2, w3b, b3p)

    # Strip batch padding and the logits lane padding.
    return out[:B, :n_out]


def init_linear_params(key, fan_in, fan_out):
    """PyTorch nn.Linear-style init (uniform +-1/sqrt(fan_in)).

    Returns weight already transposed to [in, out] and bias as [1, out]."""
    kw, kb = jax.random.split(key)
    bound = 1.0 / jnp.sqrt(jnp.float32(fan_in))
    w = jax.random.uniform(kw, (fan_in, fan_out), jnp.float32, -bound, bound)
    b = jax.random.uniform(kb, (1, fan_out), jnp.float32, -bound, bound)
    return w, b


if __name__ == "__main__":
    key = jax.random.PRNGKey(0)
    k_x, k1, k2, k3 = jax.random.split(key, 4)

    batch = 8
    input_size = 32  # MLP(input_size=32)

    x = jax.random.normal(k_x, (batch, input_size), jnp.float32)
    w1, b1 = init_linear_params(k1, input_size, 512)
    w2, b2 = init_linear_params(k2, 512, 128)
    w3, b3 = init_linear_params(k3, 128, 2)

    out = mlp_forward(x, w1, b1, w2, b2, w3, b3)
    out = jax.block_until_ready(out)
    assert out.shape == (batch, 2)

    # Reference with the same bf16-operand / f32-accumulate recipe (tight check).
    bf = jnp.bfloat16
    r = jnp.dot(x.astype(bf), w1.astype(bf), preferred_element_type=jnp.float32)
    r = jnp.maximum(r + b1, 0.0)
    r = jnp.dot(r.astype(bf), w2.astype(bf), preferred_element_type=jnp.float32)
    r = jnp.maximum(r + b2, 0.0)
    r = jnp.dot(r.astype(bf), w3.astype(bf), preferred_element_type=jnp.float32) + b3
    assert jnp.allclose(out, r, atol=1e-3, rtol=1e-3)

    # Full-f32 reference (loose check — bounds the bf16 input-rounding error).
    ref = jnp.maximum(x @ w1 + b1, 0.0)
    ref = jnp.maximum(ref @ w2 + b2, 0.0)
    ref = ref @ w3 + b3
    assert jnp.allclose(out, ref, atol=5e-2, rtol=5e-2)

    print("KERNEL_OK")
</pallas_src>

<mosaic_0001>
module attributes {stable_mosaic.version = 11 : i64} {
  func.func @mlp_kernel(%arg0: i32, %arg1: memref<8x32xbf16, #tpu.memory_space<vmem>>, %arg2: memref<32x512xbf16, #tpu.memory_space<vmem>>, %arg3: memref<1x512xf32, #tpu.memory_space<vmem>>, %arg4: memref<512x128xbf16, #tpu.memory_space<vmem>>, %arg5: memref<1x128xf32, #tpu.memory_space<vmem>>, %arg6: memref<128x128xbf16, #tpu.memory_space<vmem>>, %arg7: memref<1x128xf32, #tpu.memory_space<vmem>>, %arg8: memref<8x128xf32, #tpu.memory_space<vmem>>) attributes {dimension_semantics = [#tpu.dimension_semantics<parallel>], iteration_bounds = array<i64: 1>, scalar_prefetch = 0 : i64, scratch_operands = 0 : i64, tpu.core_type = #tpu.core_type<tc>, window_params = [{transform_indices = @transform_0, window_bounds = array<i64: 8, 32>}, {pipeline_mode = #tpu.pipeline_mode<synchronous>, transform_indices = @transform_1, window_bounds = array<i64: 32, 512>}, {pipeline_mode = #tpu.pipeline_mode<synchronous>, transform_indices = @transform_2, window_bounds = array<i64: 1, 512>}, {pipeline_mode = #tpu.pipeline_mode<synchronous>, transform_indices = @transform_3, window_bounds = array<i64: 512, 128>}, {pipeline_mode = #tpu.pipeline_mode<synchronous>, transform_indices = @transform_4, window_bounds = array<i64: 1, 128>}, {pipeline_mode = #tpu.pipeline_mode<synchronous>, transform_indices = @transform_5, window_bounds = array<i64: 128, 128>}, {pipeline_mode = #tpu.pipeline_mode<synchronous>, transform_indices = @transform_6, window_bounds = array<i64: 1, 128>}, {transform_indices = @transform_7, window_bounds = array<i64: 8, 128>}]} {
    %c0 = arith.constant 0 : index
    %c0_0 = arith.constant 0 : index
    %0 = vector.load %arg1[%c0, %c0_0] : memref<8x32xbf16, #tpu.memory_space<vmem>>, vector<8x32xbf16>
    %c0_1 = arith.constant 0 : index
    %c0_2 = arith.constant 0 : index
    %1 = vector.load %arg2[%c0_1, %c0_2] : memref<32x512xbf16, #tpu.memory_space<vmem>>, vector<32x512xbf16>
    %cst = arith.constant dense<0.000000e+00> : vector<8x512xf32>
    %2 = tpu.matmul %0, %1, %cst {dimension_numbers = #tpu.dot_dimension_numbers<[1], [0], [0], [1], [0, 0, 1, 1], [], []>} : vector<8x32xbf16>, vector<32x512xbf16>, vector<8x512xf32> -> vector<8x512xf32>
    %c0_3 = arith.constant 0 : index
    %c0_4 = arith.constant 0 : index
    %3 = vector.load %arg3[%c0_3, %c0_4] : memref<1x512xf32, #tpu.memory_space<vmem>>, vector<1x512xf32>
    %4 = vector.broadcast %3 : vector<1x512xf32> to vector<8x512xf32>
    %5 = arith.addf %2, %4 : vector<8x512xf32>
    %cst_5 = arith.constant 0.000000e+00 : f32
    %6 = vector.broadcast %cst_5 : f32 to vector<8x512xf32>
    %7 = arith.maximumf %5, %6 : vector<8x512xf32>
    %8 = arith.truncf %7 : vector<8x512xf32> to vector<8x512xbf16>
    %c0_6 = arith.constant 0 : index
    %c0_7 = arith.constant 0 : index
    %9 = vector.load %arg4[%c0_6, %c0_7] : memref<512x128xbf16, #tpu.memory_space<vmem>>, vector<512x128xbf16>
    %cst_8 = arith.constant dense<0.000000e+00> : vector<8x128xf32>
    %10 = tpu.matmul %8, %9, %cst_8 {dimension_numbers = #tpu.dot_dimension_numbers<[1], [0], [0], [1], [0, 0, 1, 1], [], []>} : vector<8x512xbf16>, vector<512x128xbf16>, vector<8x128xf32> -> vector<8x128xf32>
    %c0_9 = arith.constant 0 : index
    %c0_10 = arith.constant 0 : index
    %11 = vector.load %arg5[%c0_9, %c0_10] : memref<1x128xf32, #tpu.memory_space<vmem>>, vector<1x128xf32>
    %12 = vector.broadcast %11 : vector<1x128xf32> to vector<8x128xf32>
    %13 = arith.addf %10, %12 : vector<8x128xf32>
    %cst_11 = arith.constant 0.000000e+00 : f32
    %14 = vector.broadcast %cst_11 : f32 to vector<8x128xf32>
    %15 = arith.maximumf %13, %14 : vector<8x128xf32>
    %16 = arith.truncf %15 : vector<8x128xf32> to vector<8x128xbf16>
    %c0_12 = arith.constant 0 : index
    %c0_13 = arith.constant 0 : index
    %17 = vector.load %arg6[%c0_12, %c0_13] : memref<128x128xbf16, #tpu.memory_space<vmem>>, vector<128x128xbf16>
    %cst_14 = arith.constant dense<0.000000e+00> : vector<8x128xf32>
    %18 = tpu.matmul %16, %17, %cst_14 {dimension_numbers = #tpu.dot_dimension_numbers<[1], [0], [0], [1], [0, 0, 1, 1], [], []>} : vector<8x128xbf16>, vector<128x128xbf16>, vector<8x128xf32> -> vector<8x128xf32>
    %c0_15 = arith.constant 0 : index
    %c0_16 = arith.constant 0 : index
    %19 = vector.load %arg7[%c0_15, %c0_16] : memref<1x128xf32, #tpu.memory_space<vmem>>, vector<1x128xf32>
    %20 = vector.broadcast %19 : vector<1x128xf32> to vector<8x128xf32>
    %21 = arith.addf %18, %20 : vector<8x128xf32>
    %c0_17 = arith.constant 0 : index
    %c0_18 = arith.constant 0 : index
    %22 = vector.load %arg8[%c0_17, %c0_18] : memref<8x128xf32, #tpu.memory_space<vmem>>, vector<8x128xf32>
    tpu.vector_store %arg8[%c0_17, %c0_18], %21 {strides = array<i32>} : memref<8x128xf32, #tpu.memory_space<vmem>>, vector<8x128xf32>,
    return
  }
  func.func @transform_0(%arg0: i32) -> (i32, i32) {
    %c0_i32 = arith.constant 0 : i32
    %c0_i32_0 = arith.constant 0 : i32
    return %arg0, %c0_i32 : i32, i32
  }
  func.func @transform_1(%arg0: i32) -> (i32, i32) {
    %c0_i32 = arith.constant 0 : i32
    %c0_i32_0 = arith.constant 0 : i32
    %c0_i32_1 = arith.constant 0 : i32
    return %c0_i32, %c0_i32_0 : i32, i32
  }
  func.func @transform_2(%arg0: i32) -> (i32, i32) {
    %c0_i32 = arith.constant 0 : i32
    %c0_i32_0 = arith.constant 0 : i32
    %c0_i32_1 = arith.constant 0 : i32
    return %c0_i32, %c0_i32_0 : i32, i32
  }
  func.func @transform_3(%arg0: i32) -> (i32, i32) {
    %c0_i32 = arith.constant 0 : i32
    %c0_i32_0 = arith.constant 0 : i32
    %c0_i32_1 = arith.constant 0 : i32
    return %c0_i32, %c0_i32_0 : i32, i32
  }
  func.func @transform_4(%arg0: i32) -> (i32, i32) {
    %c0_i32 = arith.constant 0 : i32
    %c0_i32_0 = arith.constant 0 : i32
    %c0_i32_1 = arith.constant 0 : i32
    return %c0_i32, %c0_i32_0 : i32, i32
  }
  func.func @transform_5(%arg0: i32) -> (i32, i32) {
    %c0_i32 = arith.constant 0 : i32
    %c0_i32_0 = arith.constant 0 : i32
    %c0_i32_1 = arith.constant 0 : i32
    return %c0_i32, %c0_i32_0 : i32, i32
  }
  func.func @transform_6(%arg0: i32) -> (i32, i32) {
    %c0_i32 = arith.constant 0 : i32
    %c0_i32_0 = arith.constant 0 : i32
    %c0_i32_1 = arith.constant 0 : i32
    return %c0_i32, %c0_i32_0 : i32, i32
  }
  func.func @transform_7(%arg0: i32) -> (i32, i32) {
    %c0_i32 = arith.constant 0 : i32
    %c0_i32_0 = arith.constant 0 : i32
    return %arg0, %c0_i32 : i32, i32
  }
}

</mosaic_0001>

<llo_original>
// kernel: mlp_forward.1
$region0: #{mlp_forward.1}
  #allocation0 [shape = 'u32[]', space=smem, size = 0x4, offset = 0x4, fixed_abs, tag = 'smem constant byte address 0x4 - core index']
  #allocation1 [shape = 'u32[144,128]{1,0:T(1,128)}', space=vmem, size = 0x12000, scoped, tag = 'internal scratch']
  %s0 = inlined_call_operand.vmem [shape: bf16[8,32], index: 0, kind: input, shape index: {}]
  %s1 = inlined_call_operand.vmem [shape: bf16[32,512], index: 1, kind: input, shape index: {}]
  %s2 = inlined_call_operand.vmem [shape: f32[1,512], index: 2, kind: input, shape index: {}]
  %s3 = inlined_call_operand.vmem [shape: bf16[512,128], index: 3, kind: input, shape index: {}]
  %s4 = inlined_call_operand.vmem [shape: f32[1,128], index: 4, kind: input, shape index: {}]
  %s5 = inlined_call_operand.vmem [shape: bf16[128,128], index: 5, kind: input, shape index: {}]
  %s6 = inlined_call_operand.vmem [shape: f32[1,128], index: 6, kind: input, shape index: {}]
  %s7 = inlined_call_operand.vmem [shape: f32[8,128], index: 7, kind: output, shape index: {}]
  %s8 = sld [smem:[#allocation0]]
  $region38: #{mlp_forward.1} parent=0
    _
  %s10 = ssub.s32 1, %s8
  %s11 = scalar_select 0, %s10, %s8
  // Predicated region
  $region2: #{mlp_forward.1} parent=0 // pred_check
    _
  $region3: #{mlp_forward.1} parent=0 // pred_check_branch
    %13 = sbr.rel (0) target = $region5
  $region4: #{mlp_forward.1} parent=0 // pred_region
    _
  $region5: #{mlp_forward.1} parent=0 // pred_fallthru
    _
  // Predicated region
  $region6: #{mlp_forward.1} parent=0 // pred_check
    _
  $region7: #{mlp_forward.1} parent=0 // pred_check_branch
    %15 = sbr.rel (0) target = $region9
  $region8: #{mlp_forward.1} parent=0 // pred_region
    _
  $region9: #{mlp_forward.1} parent=0 // pred_fallthru
    _
  // Predicated region
  $region10: #{mlp_forward.1} parent=0 // pred_check
    _
  $region11: #{mlp_forward.1} parent=0 // pred_check_branch
    %17 = sbr.rel (0) target = $region13
  $region12: #{mlp_forward.1} parent=0 // pred_region
    _
  $region13: #{mlp_forward.1} parent=0 // pred_fallthru
    _
  // Predicated region
  $region14: #{mlp_forward.1} parent=0 // pred_check
    _
  $region15: #{mlp_forward.1} parent=0 // pred_check_branch
    %19 = sbr.rel (0) target = $region17
  $region16: #{mlp_forward.1} parent=0 // pred_region
    _
  $region17: #{mlp_forward.1} parent=0 // pred_fallthru
    _
  // Predicated region
  $region18: #{mlp_forward.1} parent=0 // pred_check
    _
  $region19: #{mlp_forward.1} parent=0 // pred_check_branch
    %21 = sbr.rel (0) target = $region21
  $region20: #{mlp_forward.1} parent=0 // pred_region
    _
  $region21: #{mlp_forward.1} parent=0 // pred_fallthru
    _
  // Predicated region
  $region22: #{mlp_forward.1} parent=0 // pred_check
    _
  $region23: #{mlp_forward.1} parent=0 // pred_check_branch
    %23 = sbr.rel (0) target = $region25
  $region24: #{mlp_forward.1} parent=0 // pred_region
    _
  $region25: #{mlp_forward.1} parent=0 // pred_fallthru
    _
  // Predicated region
  $region26: #{mlp_forward.1} parent=0 // pred_check
    _
  $region27: #{mlp_forward.1} parent=0 // pred_check_branch
    %25 = sbr.rel (0) target = $region29
  $region28: #{mlp_forward.1} parent=0 // pred_region
    _
  $region29: #{mlp_forward.1} parent=0 // pred_fallthru
    _
  %v27 = vld [vmem:[%s0] sm:$0xf]
  %v28 = vld [vmem:[%s1] sm:$0xff]
  %v29 = vld [vmem:[%s1 + $0x8] sm:$0xff]
  %v30 = vld [vmem:[%s1 + $0x10] sm:$0xff]
  %v31 = vld [vmem:[%s1 + $0x18] sm:$0xff]
  %v32 = vld [vmem:[%s1 + $0x20] sm:$0xff]
  %v33 = vld [vmem:[%s1 + $0x28] sm:$0xff]
  %v34 = vld [vmem:[%s1 + $0x30] sm:$0xff]
  %v35 = vld [vmem:[%s1 + $0x38] sm:$0xff]
  %v36 = vld [vmem:[%s2] sm:$0xf]
  %v38 = vlaneseq
  %v39 = vshrl.u32 %v38, 7
  %v40 = vsub.s32 0, %v39
  %v41 = vrot.slane %v36, %v40
  %v42 = vlaneseq
  %v43 = vshrl.u32 %v42, 7
  %v44 = vsub.s32 1, %v43
  %v45 = vrot.slane %v36, %v44
  %v46 = vlaneseq
  %v47 = vshrl.u32 %v46, 7
  %v48 = vsub.s32 2, %v47
  %v49 = vrot.slane %v36, %v48
  %v50 = vlaneseq
  %v51 = vshrl.u32 %v50, 7
  %v52 = vsub.s32 3, %v51
  %v53 = vrot.slane %v36, %v52
  %v66 = vunpack.c.l.b16 %v28
  %v67 = vunpack.c.h.b16 %v28
  %v68 = vunpack.c.l.b16 %v29
  %v69 = vunpack.c.h.b16 %v29
  %v70 = vunpack.c.l.b16 %v30
  %v71 = vunpack.c.h.b16 %v30
  %v72 = vunpack.c.l.b16 %v31
  %v73 = vunpack.c.h.b16 %v31
  %v74 = vunpack.c.l.b16 %v32
  %v75 = vunpack.c.h.b16 %v32
  %v76 = vunpack.c.l.b16 %v33
  %v77 = vunpack.c.h.b16 %v33
  %v78 = vunpack.c.l.b16 %v34
  %v79 = vunpack.c.h.b16 %v34
  %v80 = vunpack.c.l.b16 %v35
  %v81 = vunpack.c.h.b16 %v35
  %v82 = vpack.c.b16 %v70, %v66
  %v83 = vpack.c.b16 %v71, %v67
  %v84 = vpack.c.b16 %v72, %v68
  %v85 = vpack.c.b16 %v73, %v69
  %v86 = vpack.c.b16 %v78, %v74
  %v87 = vpack.c.b16 %v79, %v75
  %v88 = vpack.c.b16 %v80, %v76
  %v89 = vpack.c.b16 %v81, %v77
  %vm98 = vcmask 261120
  %v100 = vsel %vm98, %v27, 0
  %102 = vmatprep.subr.bf16.mxu0 %v83
  %103 = vmatpush1.bf16.msra.mxu0 %v82
  %104 = vmatprep.subr.bf16.mxu0 %v87
  %105 = vmatpush1.bf16.msra.mxu0 %v86
  %106 = vmatprep.subr.bf16.mxu0 0
  %107 = vmatpush1.bf16.msra.mxu0 0
  %108 = vmatprep.subr.bf16.mxu0 0
  %109 = vmatpush1.bf16.msra.mxu0 0
  %110 = vmatprep.subr.bf16.mxu0 0
  %111 = vmatpush1.bf16.msra.mxu0 0
  %112 = vmatprep.subr.bf16.mxu0 0
  %113 = vmatpush1.bf16.msra.mxu0 0
  %114 = vmatprep.subr.bf16.mxu0 0
  %115 = vmatpush1.bf16.msra.mxu0 0
  %116 = vmatprep.subr.bf16.mxu0 0
  %117 = vmatpush1.bf16.msra.mxu0 0
  %118 = vmatprep.subr.bf16.mxu0 0
  %119 = vmatpush1.bf16.msra.mxu0 0
  %120 = vmatprep.subr.bf16.mxu0 0
  %121 = vmatpush1.bf16.msra.mxu0 0
  %122 = vmatprep.subr.bf16.mxu0 0
  %123 = vmatpush1.bf16.msra.mxu0 0
  %124 = vmatprep.subr.bf16.mxu0 0
  %125 = vmatpush1.bf16.msra.mxu0 0
  %126 = vmatprep.subr.bf16.mxu0 0
  %127 = vmatpush1.bf16.msra.mxu0 0
  %128 = vmatprep.subr.bf16.mxu0 0
  %129 = vmatpush1.bf16.msra.mxu0 0
  %130 = vmatprep.subr.bf16.mxu0 0
  %131 = vmatpush1.bf16.msra.mxu0 0
  %132 = vmatprep.subr.bf16.mxu0 0
  %133 = vmatpush1.bf16.msra.mxu0 0
  %134 = vmatprep.mubr.bf16.mxu0 0
  %135 = vmatmul.mubr.bf16.gmra.mrb[0].mxu0 %v100
  %v136 = vpop.f32.mrb[0].mxu0
  %v137 = vadd.f32 %v41, %v136
  %v138 = vpop.f32.mrb[0].mxu0
  %v139 = vadd.f32 %v45, %v138
  %v140 = vpop.f32.mrb[0].mxu0
  %v141 = vpop.f32.mrb[0].mxu0
  %142 = vdwg.mxu0
  %143 = vmatprep.subr.bf16.mxu0 %v85
  %144 = vmatpush1.bf16.msra.mxu0 %v84
  %145 = vmatprep.subr.bf16.mxu0 %v89
  %146 = vmatpush1.bf16.msra.mxu0 %v88
  %147 = vmatprep.subr.bf16.mxu0 0
  %148 = vmatpush1.bf16.msra.mxu0 0
  %149 = vmatprep.subr.bf16.mxu0 0
  %150 = vmatpush1.bf16.msra.mxu0 0
  %151 = vmatprep.subr.bf16.mxu0 0
  %152 = vmatpush1.bf16.msra.mxu0 0
  %153 = vmatprep.subr.bf16.mxu0 0
  %154 = vmatpush1.bf16.msra.mxu0 0
  %155 = vmatprep.subr.bf16.mxu0 0
  %156 = vmatpush1.bf16.msra.mxu0 0
  %157 = vmatprep.subr.bf16.mxu0 0
  %158 = vmatpush1.bf16.msra.mxu0 0
  %159 = vmatprep.subr.bf16.mxu0 0
  %160 = vmatpush1.bf16.msra.mxu0 0
  %161 = vmatprep.subr.bf16.mxu0 0
  %162 = vmatpush1.bf16.msra.mxu0 0
  %163 = vmatprep.subr.bf16.mxu0 0
  %164 = vmatpush1.bf16.msra.mxu0 0
  %165 = vmatprep.subr.bf16.mxu0 0
  %166 = vmatpush1.bf16.msra.mxu0 0
  %167 = vmatprep.subr.bf16.mxu0 0
  %168 = vmatpush1.bf16.msra.mxu0 0
  %169 = vmatprep.subr.bf16.mxu0 0
  %170 = vmatpush1.bf16.msra.mxu0 0
  %171 = vmatprep.subr.bf16.mxu0 0
  %172 = vmatpush1.bf16.msra.mxu0 0
  %173 = vmatprep.subr.bf16.mxu0 0
  %174 = vmatpush1.bf16.msra.mxu0 0
  %175 = vmatprep.mubr.bf16.mxu0 0
  %176 = vmatmul.mubr.bf16.gmra.mrb[0].mxu0 %v100
  %v177 = vpop.f32.mrb[0].mxu0
  %v178 = vadd.f32 %v49, %v177
  %v179 = vpop.f32.mrb[0].mxu0
  %v180 = vadd.f32 %v53, %v179
  %v181 = vpop.f32.mrb[0].mxu0
  %v182 = vpop.f32.mrb[0].mxu0
  %183 = vdwg.mxu0
  %v184 = vmax.f32 %v137, 0.0
  %v185 = vmax.f32 %v139, 0.0
  %v186 = vmax.f32 %v178, 0.0
  %v187 = vmax.f32 %v180, 0.0
  %v188 = vpack.c.bf16 %v184, %v184
  %v189 = vpack.c.bf16 %v185, %v185
  %v190 = vpack.c.bf16 %v186, %v186
  %v191 = vpack.c.bf16 %v187, %v187
  %v192 = vld [vmem:[%s3] sm:$0xf]
  %v193 = vld [vmem:[%s3 + $0x4] sm:$0xf]
  %v194 = vld [vmem:[%s3 + $0x8] sm:$0xf]
  %v195 = vld [vmem:[%s3 + $0xc] sm:$0xf]
  %v196 = vld [vmem:[%s3 + $0x10] sm:$0xf]
  %v197 = vld [vmem:[%s3 + $0x14] sm:$0xf]
  %v198 = vld [vmem:[%s3 + $0x18] sm:$0xf]
  %v199 = vld [vmem:[%s3 + $0x1c] sm:$0xf]
  %v200 = vld [vmem:[%s3 + $0x20] sm:$0xf]
  %v201 = vld [vmem:[%s3 + $0x24] sm:$0xf]
  %v202 = vld [vmem:[%s3 + $0x28] sm:$0xf]
  %v203 = vld [vmem:[%s3 + $0x2c] sm:$0xf]
  %v204 = vld [vmem:[%s3 + $0x30] sm:$0xf]
  %v205 = vld [vmem:[%s3 + $0x34] sm:$0xf]
  %v206 = vld [vmem:[%s3 + $0x38] sm:$0xf]
  %v207 = vld [vmem:[%s3 + $0x3c] sm:$0xf]
  %v208 = vld [vmem:[%s3 + $0x40] sm:$0xf]
  %v209 = vld [vmem:[%s3 + $0x44] sm:$0xf]
  %v210 = vld [vmem:[%s3 + $0x48] sm:$0xf]
  %v211 = vld [vmem:[%s3 + $0x4c] sm:$0xf]
  %v212 = vld [vmem:[%s3 + $0x50] sm:$0xf]
  %v213 = vld [vmem:[%s3 + $0x54] sm:$0xf]
  %v214 = vld [vmem:[%s3 + $0x58] sm:$0xf]
  %v215 = vld [vmem:[%s3 + $0x5c] sm:$0xf]
  %v216 = vld [vmem:[%s3 + $0x60] sm:$0xf]
  %v217 = vld [vmem:[%s3 + $0x64] sm:$0xf]
  %v218 = vld [vmem:[%s3 + $0x68] sm:$0xf]
  %v219 = vld [vmem:[%s3 + $0x6c] sm:$0xf]
  %v220 = vld [vmem:[%s3 + $0x70] sm:$0xf]
  %v221 = vld [vmem:[%s3 + $0x74] sm:$0xf]
  %v222 = vld [vmem:[%s3 + $0x78] sm:$0xf]
  %v223 = vld [vmem:[%s3 + $0x7c] sm:$0xf]
  %v224 = vld [vmem:[%s3 + $0x80] sm:$0xf]
  %v225 = vld [vmem:[%s3 + $0x84] sm:$0xf]
  %v226 = vld [vmem:[%s3 + $0x88] sm:$0xf]
  %v227 = vld [vmem:[%s3 + $0x8c] sm:$0xf]
  %v228 = vld [vmem:[%s3 + $0x90] sm:$0xf]
  %v229 = vld [vmem:[%s3 + $0x94] sm:$0xf]
  %v230 = vld [vmem:[%s3 + $0x98] sm:$0xf]
  %v231 = vld [vmem:[%s3 + $0x9c] sm:$0xf]
  %v232 = vld [vmem:[%s3 + $0xa0] sm:$0xf]
  %v233 = vld [vmem:[%s3 + $0xa4] sm:$0xf]
  %v234 = vld [vmem:[%s3 + $0xa8] sm:$0xf]
  %v235 = vld [vmem:[%s3 + $0xac] sm:$0xf]
  %v236 = vld [vmem:[%s3 + $0xb0] sm:$0xf]
  %v237 = vld [vmem:[%s3 + $0xb4] sm:$0xf]
  %v238 = vld [vmem:[%s3 + $0xb8] sm:$0xf]
  %v239 = vld [vmem:[%s3 + $0xbc] sm:$0xf]
  %v240 = vld [vmem:[%s3 + $0xc0] sm:$0xf]
  %v241 = vld [vmem:[%s3 + $0xc4] sm:$0xf]
  %v242 = vld [vmem:[%s3 + $0xc8] sm:$0xf]
  %v243 = vld [vmem:[%s3 + $0xcc] sm:$0xf]
  %v244 = vld [vmem:[%s3 + $0xd0] sm:$0xf]
  %v245 = vld [vmem:[%s3 + $0xd4] sm:$0xf]
  %v246 = vld [vmem:[%s3 + $0xd8] sm:$0xf]
  %v247 = vld [vmem:[%s3 + $0xdc] sm:$0xf]
  %v248 = vld [vmem:[%s3 + $0xe0] sm:$0xf]
  %v249 = vld [vmem:[%s3 + $0xe4] sm:$0xf]
  %v250 = vld [vmem:[%s3 + $0xe8] sm:$0xf]
  %v251 = vld [vmem:[%s3 + $0xec] sm:$0xf]
  %v252 = vld [vmem:[%s3 + $0xf0] sm:$0xf]
  %v253 = vld [vmem:[%s3 + $0xf4] sm:$0xf]
  %v254 = vld [vmem:[%s3 + $0xf8] sm:$0xf]
  %v255 = vld [vmem:[%s3 + $0xfc] sm:$0xf]
  %v256 = vld [vmem:[%s4] sm:$0x1]
  %v258 = vlaneseq
  %v259 = vshrl.u32 %v258, 7
  %v260 = vsub.s32 0, %v259
  %v261 = vrot.slane %v256, %v260
  %v327 = vunpack.c.l.b16 %v192
  %v328 = vunpack.c.l.b16 %v193
  %v329 = vunpack.c.l.b16 %v194
  %v330 = vunpack.c.l.b16 %v195
  %v331 = vunpack.c.l.b16 %v196
  %v332 = vunpack.c.l.b16 %v197
  %v333 = vunpack.c.l.b16 %v198
  %v334 = vunpack.c.l.b16 %v199
  %v335 = vunpack.c.l.b16 %v200
  %v336 = vunpack.c.l.b16 %v201
  %v337 = vunpack.c.l.b16 %v202
  %v338 = vunpack.c.l.b16 %v203
  %v339 = vunpack.c.l.b16 %v204
  %v340 = vunpack.c.l.b16 %v205
  %v341 = vunpack.c.l.b16 %v206
  %v342 = vunpack.c.l.b16 %v207
  %v343 = vunpack.c.l.b16 %v208
  %v344 = vunpack.c.l.b16 %v209
  %v345 = vunpack.c.l.b16 %v210
  %v346 = vunpack.c.l.b16 %v211
  %v347 = vunpack.c.l.b16 %v212
  %v348 = vunpack.c.l.b16 %v213
  %v349 = vunpack.c.l.b16 %v214
  %v350 = vunpack.c.l.b16 %v215
  %v351 = vunpack.c.l.b16 %v216
  %v352 = vunpack.c.l.b16 %v217
  %v353 = vunpack.c.l.b16 %v218
  %v354 = vunpack.c.l.b16 %v219
  %v355 = vunpack.c.l.b16 %v220
  %v356 = vunpack.c.l.b16 %v221
  %v357 = vunpack.c.l.b16 %v222
  %v358 = vunpack.c.l.b16 %v223
  %v359 = vunpack.c.l.b16 %v224
  %v360 = vunpack.c.l.b16 %v225
  %v361 = vunpack.c.l.b16 %v226
  %v362 = vunpack.c.l.b16 %v227
  %v363 = vunpack.c.l.b16 %v228
  %v364 = vunpack.c.l.b16 %v229
  %v365 = vunpack.c.l.b16 %v230
  %v366 = vunpack.c.l.b16 %v231
  %v367 = vunpack.c.l.b16 %v232
  %v368 = vunpack.c.l.b16 %v233
  %v369 = vunpack.c.l.b16 %v234
  %v370 = vunpack.c.l.b16 %v235
  %v371 = vunpack.c.l.b16 %v236
  %v372 = vunpack.c.l.b16 %v237
  %v373 = vunpack.c.l.b16 %v238
  %v374 = vunpack.c.l.b16 %v239
  %v375 = vunpack.c.l.b16 %v240
  %v376 = vunpack.c.l.b16 %v241
  %v377 = vunpack.c.l.b16 %v242
  %v378 = vunpack.c.l.b16 %v243
  %v379 = vunpack.c.l.b16 %v244
  %v380 = vunpack.c.l.b16 %v245
  %v381 = vunpack.c.l.b16 %v246
  %v382 = vunpack.c.l.b16 %v247
  %v383 = vunpack.c.l.b16 %v248
  %v384 = vunpack.c.l.b16 %v249
  %v385 = vunpack.c.l.b16 %v250
  %v386 = vunpack.c.l.b16 %v251
  %v387 = vunpack.c.l.b16 %v252
  %v388 = vunpack.c.l.b16 %v253
  %v389 = vunpack.c.l.b16 %v254
  %v390 = vunpack.c.l.b16 %v255
  %v391 = vpack.c.b16 %v328, %v327
  %v392 = vpack.c.b16 %v330, %v329
  %v393 = vpack.c.b16 %v332, %v331
  %v394 = vpack.c.b16 %v334, %v333
  %v395 = vpack.c.b16 %v336, %v335
  %v396 = vpack.c.b16 %v338, %v337
  %v397 = vpack.c.b16 %v340, %v339
  %v398 = vpack.c.b16 %v342, %v341
  %v399 = vpack.c.b16 %v344, %v343
  %v400 = vpack.c.b16 %v346, %v345
  %v401 = vpack.c.b16 %v348, %v347
  %v402 = vpack.c.b16 %v350, %v349
  %v403 = vpack.c.b16 %v352, %v351
  %v404 = vpack.c.b16 %v354, %v353
  %v405 = vpack.c.b16 %v356, %v355
  %v406 = vpack.c.b16 %v358, %v357
  %v407 = vpack.c.b16 %v360, %v359
  %v408 = vpack.c.b16 %v362, %v361
  %v409 = vpack.c.b16 %v364, %v363
  %v410 = vpack.c.b16 %v366, %v365
  %v411 = vpack.c.b16 %v368, %v367
  %v412 = vpack.c.b16 %v370, %v369
  %v413 = vpack.c.b16 %v372, %v371
  %v414 = vpack.c.b16 %v374, %v373
  %v415 = vpack.c.b16 %v376, %v375
  %v416 = vpack.c.b16 %v378, %v377
  %v417 = vpack.c.b16 %v380, %v379
  %v418 = vpack.c.b16 %v382, %v381
  %v419 = vpack.c.b16 %v384, %v383
  %v420 = vpack.c.b16 %v386, %v385
  %v421 = vpack.c.b16 %v388, %v387
  %v422 = vpack.c.b16 %v390, %v389
  %455 = vmatprep.subr.bf16.mxu0 0
  %456 = vmatpush1.bf16.msra.mxu0 %v391
  %457 = vmatprep.subr.bf16.mxu0 0
  %458 = vmatpush1.bf16.msra.mxu0 %v392
  %459 = vmatprep.subr.bf16.mxu0 0
  %460 = vmatpush1.bf16.msra.mxu0 %v393
  %461 = vmatprep.subr.bf16.mxu0 0
  %462 = vmatpush1.bf16.msra.mxu0 %v394
  %463 = vmatprep.subr.bf16.mxu0 0
  %464 = vmatpush1.bf16.msra.mxu0 %v395
  %465 = vmatprep.subr.bf16.mxu0 0
  %466 = vmatpush1.bf16.msra.mxu0 %v396
  %467 = vmatprep.subr.bf16.mxu0 0
  %468 = vmatpush1.bf16.msra.mxu0 %v397
  %469 = vmatprep.subr.bf16.mxu0 0
  %470 = vmatpush1.bf16.msra.mxu0 %v398
  %471 = vmatprep.subr.bf16.mxu0 0
  %472 = vmatpush1.bf16.msra.mxu0 %v399
  %473 = vmatprep.subr.bf16.mxu0 0
  %474 = vmatpush1.bf16.msra.mxu0 %v400
  %475 = vmatprep.subr.bf16.mxu0 0
  %476 = vmatpush1.bf16.msra.mxu0 %v401
  %477 = vmatprep.subr.bf16.mxu0 0
  %478 = vmatpush1.bf16.msra.mxu0 %v402
  %479 = vmatprep.subr.bf16.mxu0 0
  %480 = vmatpush1.bf16.msra.mxu0 %v403
  %481 = vmatprep.subr.bf16.mxu0 0
  %482 = vmatpush1.bf16.msra.mxu0 %v404
  %483 = vmatprep.subr.bf16.mxu0 0
  %484 = vmatpush1.bf16.msra.mxu0 %v405
  %485 = vmatprep.subr.bf16.mxu0 0
  %486 = vmatpush1.bf16.msra.mxu0 %v406
  %487 = vmatprep.mubr.bf16.mxu0 %v189
  %488 = vmatmul.mubr.bf16.gmra.mrb[0].mxu0 %v188
  %v489 = vpop.f32.mrb[0].mxu0
  %v490 = vadd.f32 %v261, %v489
  %v491 = vpop.f32.mrb[0].mxu0
  %v492 = vpop.f32.mrb[0].mxu0
  %v493 = vpop.f32.mrb[0].mxu0
  %494 = vdwg.mxu0
  %495 = vmatprep.subr.bf16.mxu0 0
  %496 = vmatpush1.bf16.msra.mxu0 %v407
  %497 = vmatprep.subr.bf16.mxu0 0
  %498 = vmatpush1.bf16.msra.mxu0 %v408
  %499 = vmatprep.subr.bf16.mxu0 0
  %500 = vmatpush1.bf16.msra.mxu0 %v409
  %501 = vmatprep.subr.bf16.mxu0 0
  %502 = vmatpush1.bf16.msra.mxu0 %v410
  %503 = vmatprep.subr.bf16.mxu0 0
  %504 = vmatpush1.bf16.msra.mxu0 %v411
  %505 = vmatprep.subr.bf16.mxu0 0
  %506 = vmatpush1.bf16.msra.mxu0 %v412
  %507 = vmatprep.subr.bf16.mxu0 0
  %508 = vmatpush1.bf16.msra.mxu0 %v413
  %509 = vmatprep.subr.bf16.mxu0 0
  %510 = vmatpush1.bf16.msra.mxu0 %v414
  %511 = vmatprep.subr.bf16.mxu0 0
  %512 = vmatpush1.bf16.msra.mxu0 %v415
  %513 = vmatprep.subr.bf16.mxu0 0
  %514 = vmatpush1.bf16.msra.mxu0 %v416
  %515 = vmatprep.subr.bf16.mxu0 0
  %516 = vmatpush1.bf16.msra.mxu0 %v417
  %517 = vmatprep.subr.bf16.mxu0 0
  %518 = vmatpush1.bf16.msra.mxu0 %v418
  %519 = vmatprep.subr.bf16.mxu0 0
  %520 = vmatpush1.bf16.msra.mxu0 %v419
  %521 = vmatprep.subr.bf16.mxu0 0
  %522 = vmatpush1.bf16.msra.mxu0 %v420
  %523 = vmatprep.subr.bf16.mxu0 0
  %524 = vmatpush1.bf16.msra.mxu0 %v421
  %525 = vmatprep.subr.bf16.mxu0 0
  %526 = vmatpush1.bf16.msra.mxu0 %v422
  %527 = vmatprep.mubr.bf16.mxu0 %v191
  %528 = vmatmul.mubr.bf16.gmra.mrb[0].mxu0 %v190
  %v529 = vpop.f32.mrb[0].mxu0
  %v530 = vadd.f32 %v490, %v529
  %v531 = vpop.f32.mrb[0].mxu0
  %v532 = vpop.f32.mrb[0].mxu0
  %v533 = vpop.f32.mrb[0].mxu0
  %534 = vdwg.mxu0
  %v535 = vmax.f32 %v530, 0.0
  %v536 = vpack.c.bf16 %v535, %v535
  %v537 = vld [vmem:[%s5] sm:$0xf]
  %v538 = vld [vmem:[%s5 + $0x4] sm:$0xf]
  %v539 = vld [vmem:[%s5 + $0x8] sm:$0xf]
  %v540 = vld [vmem:[%s5 + $0xc] sm:$0xf]
  %v541 = vld [vmem:[%s5 + $0x10] sm:$0xf]
  %v542 = vld [vmem:[%s5 + $0x14] sm:$0xf]
  %v543 = vld [vmem:[%s5 + $0x18] sm:$0xf]
  %v544 = vld [vmem:[%s5 + $0x1c] sm:$0xf]
  %v545 = vld [vmem:[%s5 + $0x20] sm:$0xf]
  %v546 = vld [vmem:[%s5 + $0x24] sm:$0xf]
  %v547 = vld [vmem:[%s5 + $0x28] sm:$0xf]
  %v548 = vld [vmem:[%s5 + $0x2c] sm:$0xf]
  %v549 = vld [vmem:[%s5 + $0x30] sm:$0xf]
  %v550 = vld [vmem:[%s5 + $0x34] sm:$0xf]
  %v551 = vld [vmem:[%s5 + $0x38] sm:$0xf]
  %v552 = vld [vmem:[%s5 + $0x3c] sm:$0xf]
  %v553 = vld [vmem:[%s6] sm:$0x1]
  %v555 = vlaneseq
  %v556 = vshrl.u32 %v555, 7
  %v557 = vsub.s32 0, %v556
  %v558 = vrot.slane %v553, %v557
  %v576 = vunpack.c.l.b16 %v537
  %v577 = vunpack.c.l.b16 %v538
  %v578 = vunpack.c.l.b16 %v539
  %v579 = vunpack.c.l.b16 %v540
  %v580 = vunpack.c.l.b16 %v541
  %v581 = vunpack.c.l.b16 %v542
  %v582 = vunpack.c.l.b16 %v543
  %v583 = vunpack.c.l.b16 %v544
  %v584 = vunpack.c.l.b16 %v545
  %v585 = vunpack.c.l.b16 %v546
  %v586 = vunpack.c.l.b16 %v547
  %v587 = vunpack.c.l.b16 %v548
  %v588 = vunpack.c.l.b16 %v549
  %v589 = vunpack.c.l.b16 %v550
  %v590 = vunpack.c.l.b16 %v551
  %v591 = vunpack.c.l.b16 %v552
  %v592 = vpack.c.b16 %v577, %v576
  %v593 = vpack.c.b16 %v579, %v578
  %v594 = vpack.c.b16 %v581, %v580
  %v595 = vpack.c.b16 %v583, %v582
  %v596 = vpack.c.b16 %v585, %v584
  %v597 = vpack.c.b16 %v587, %v586
  %v598 = vpack.c.b16 %v589, %v588
  %v599 = vpack.c.b16 %v591, %v590
  %608 = vmatprep.subr.bf16.mxu0 0
  %609 = vmatpush1.bf16.msra.mxu0 %v592
  %610 = vmatprep.subr.bf16.mxu0 0
  %611 = vmatpush1.bf16.msra.mxu0 %v593
  %612 = vmatprep.subr.bf16.mxu0 0
  %613 = vmatpush1.bf16.msra.mxu0 %v594
  %614 = vmatprep.subr.bf16.mxu0 0
  %615 = vmatpush1.bf16.msra.mxu0 %v595
  %616 = vmatprep.subr.bf16.mxu0 0
  %617 = vmatpush1.bf16.msra.mxu0 %v596
  %618 = vmatprep.subr.bf16.mxu0 0
  %619 = vmatpush1.bf16.msra.mxu0 %v597
  %620 = vmatprep.subr.bf16.mxu0 0
  %621 = vmatpush1.bf16.msra.mxu0 %v598
  %622 = vmatprep.subr.bf16.mxu0 0
  %623 = vmatpush1.bf16.msra.mxu0 %v599
  %624 = vmatprep.subr.bf16.mxu0 0
  %625 = vmatpush1.bf16.msra.mxu0 0
  %626 = vmatprep.subr.bf16.mxu0 0
  %627 = vmatpush1.bf16.msra.mxu0 0
  %628 = vmatprep.subr.bf16.mxu0 0
  %629 = vmatpush1.bf16.msra.mxu0 0
  %630 = vmatprep.subr.bf16.mxu0 0
  %631 = vmatpush1.bf16.msra.mxu0 0
  %632 = vmatprep.subr.bf16.mxu0 0
  %633 = vmatpush1.bf16.msra.mxu0 0
  %634 = vmatprep.subr.bf16.mxu0 0
  %635 = vmatpush1.bf16.msra.mxu0 0
  %636 = vmatprep.subr.bf16.mxu0 0
  %637 = vmatpush1.bf16.msra.mxu0 0
  %638 = vmatprep.subr.bf16.mxu0 0
  %639 = vmatpush1.bf16.msra.mxu0 0
  %640 = vmatprep.mubr.bf16.mxu0 0
  %641 = vmatmul.mubr.bf16.gmra.mrb[0].mxu0 %v536
  %v642 = vpop.f32.mrb[0].mxu0
  %v643 = vadd.f32 %v558, %v642
  %v644 = vpop.f32.mrb[0].mxu0
  %v645 = vpop.f32.mrb[0].mxu0
  %v646 = vpop.f32.mrb[0].mxu0
  %647 = vdwg.mxu0
  %648 = vst [vmem:[%s7] sm:$0xff] %v643
  // Predicated region
  $region30: #{mlp_forward.1} parent=0 // pred_check
    _
  $region31: #{mlp_forward.1} parent=0 // pred_check_branch
    %650 = sbr.rel (0) target = $region33
  $region32: #{mlp_forward.1} parent=0 // pred_region
    _
  $region33: #{mlp_forward.1} parent=0 // pred_fallthru
    _
  // Predicated region
  $region34: #{mlp_forward.1} parent=0 // pred_check
    _
  $region35: #{mlp_forward.1} parent=0 // pred_check_branch
    %652 = sbr.rel (0) target = $region37
  $region36: #{mlp_forward.1} parent=0 // pred_region
    _
  $region37: #{mlp_forward.1} parent=0 // pred_fallthru
    _

</llo_original>
